<compile_context>
chip_gen: v7x
topology: tpu7x:2x2x1
jax: 0.10.0
libtpu: 0.0.40
codegen_flags: <defaults>
</compile_context>

<pallas_src>
import functools

import jax
import jax.numpy as jnp
import numpy as np
from jax import lax
from jax.experimental import pallas as pl
from jax.experimental.pallas import tpu as pltpu


def _upsample_kernel(x_ref, sel_ref, o_ref, *, precision):
    # x_ref:   (R, W)    input rows (original dtype)
    # sel_ref: (W, 4W)   one-hot selector, sel[w, c] = (w == (c % 2W) // 2), f32
    # o_ref:   (R, 4W)   output rows: [coldup(row) | coldup(row)]
    x = x_ref[...].astype(jnp.float32)
    y = jnp.dot(
        x,
        sel_ref[...],
        preferred_element_type=jnp.float32,
        precision=precision,
    )
    o_ref[...] = y.astype(o_ref.dtype)


def _choose_block_rows(m, w, itemsize):
    """Largest row tile that (a) divides M, (b) respects dtype sublane packing,
    (c) keeps the in+out tile around <= 2 MiB, (d) leaves >= 2 grid steps."""
    min_rows = max(8, 32 // itemsize)          # sublane granule per dtype
    if m <= min_rows or m % min_rows != 0:
        return m                               # single full block (always legal)
    row_bytes = 5 * w * itemsize               # 1x input + 4x output per row
    cap_rows = max(min_rows, (2 * 1024 * 1024) // row_bytes)
    limit = min(m // 2, cap_rows)              # keep >= 2 grid steps (v7x: 2 TCs)
    best = None
    for r in range(min_rows, limit + 1, min_rows):
        if m % r == 0:
            best = r
    return best if best is not None else m


def upsample_nearest_2x(x):
    """Equivalent of nn.Upsample(scale_factor=2, mode='nearest') on NCHW input."""
    n, c, h, w = x.shape
    dtype = x.dtype
    itemsize = jnp.dtype(dtype).itemsize
    m = n * c * h

    # Flattened views: (M, W) -> (M, 4W). The reshape back to (N, C, 2H, 2W)
    # at the end is contiguous, i.e. metadata only.
    x2 = x.reshape(m, w)

    # One-hot column selector: out2[r, 2W*di + 2j + dj] = x2[r, j].
    cols = jnp.arange(4 * w)
    sel = (jnp.arange(w)[:, None] == (cols[None, :] % (2 * w)) // 2).astype(jnp.float32)

    # f32 inputs need HIGHEST so the one-hot dot is bit-exact; narrower float
    # inputs are already exact in a single pass, so skip the multi-pass
    # emulation there (cheaper on v5e's MXU).
    precision = (lax.Precision.HIGHEST
                 if dtype == jnp.float32 else lax.Precision.DEFAULT)

    r = _choose_block_rows(m, w, itemsize)
    grid = (m // r,)

    out2 = pl.pallas_call(
        functools.partial(_upsample_kernel, precision=precision),
        out_shape=jax.ShapeDtypeStruct((m, 4 * w), dtype),
        grid=grid,
        in_specs=[
            pl.BlockSpec((r, w), lambda i: (i, 0)),
            pl.BlockSpec((w, 4 * w), lambda i: (0, 0)),   # constant block, fetched once
        ],
        out_specs=pl.BlockSpec((r, 4 * w), lambda i: (i, 0)),
        compiler_params=pltpu.CompilerParams(
            dimension_semantics=("parallel",)),
        cost_estimate=pl.CostEstimate(
            flops=2 * m * w * 4 * w,
            transcendentals=0,
            bytes_accessed=(m * w + m * 4 * w) * itemsize + w * 4 * w * 4),
    )(x2, sel)

    return out2.reshape(n, c, 2 * h, 2 * w)


if __name__ == "__main__":
    key = jax.random.PRNGKey(0)
    x = jax.random.normal(key, (2, 4, 16, 16), dtype=jnp.float32)

    out = jax.block_until_ready(upsample_nearest_2x(x))

    # Pure-JAX reference: nearest 2x upsample (matches torch.nn.Upsample).
    ref = jnp.repeat(jnp.repeat(x, 2, axis=2), 2, axis=3)
    assert out.shape == (2, 4, 32, 32)
    assert out.dtype == x.dtype
    assert np.allclose(np.asarray(out), np.asarray(ref), rtol=1e-6, atol=1e-6)

    print("KERNEL_OK")
</pallas_src>

<mosaic_0001>
module attributes {stable_mosaic.version = 11 : i64} {
  func.func @_upsample_kernel(%arg0: i32, %arg1: memref<64x16xf32, #tpu.memory_space<vmem>>, %arg2: memref<16x64xf32, #tpu.memory_space<vmem>>, %arg3: memref<64x64xf32, #tpu.memory_space<vmem>>) attributes {dimension_semantics = [#tpu.dimension_semantics<parallel>], iteration_bounds = array<i64: 2>, scalar_prefetch = 0 : i64, scratch_operands = 0 : i64, tpu.core_type = #tpu.core_type<tc>, window_params = [{transform_indices = @transform_0, window_bounds = array<i64: 64, 16>}, {pipeline_mode = #tpu.pipeline_mode<synchronous>, transform_indices = @transform_1, window_bounds = array<i64: 16, 64>}, {transform_indices = @transform_2, window_bounds = array<i64: 64, 64>}]} {
    %c0 = arith.constant 0 : index
    %c0_0 = arith.constant 0 : index
    %0 = vector.load %arg1[%c0, %c0_0] : memref<64x16xf32, #tpu.memory_space<vmem>>, vector<64x16xf32>
    %c0_1 = arith.constant 0 : index
    %c0_2 = arith.constant 0 : index
    %1 = vector.load %arg2[%c0_1, %c0_2] : memref<16x64xf32, #tpu.memory_space<vmem>>, vector<16x64xf32>
    %cst = arith.constant dense<0.000000e+00> : vector<64x64xf32>
    %2 = tpu.matmul %0, %1, %cst {dimension_numbers = #tpu.dot_dimension_numbers<[1], [0], [0], [1], [0, 0, 1, 1], [], []>, precision = #tpu.contract_precision<fp32>} : vector<64x16xf32>, vector<16x64xf32>, vector<64x64xf32> -> vector<64x64xf32>
    %c0_3 = arith.constant 0 : index
    %c0_4 = arith.constant 0 : index
    %3 = vector.load %arg3[%c0_3, %c0_4] : memref<64x64xf32, #tpu.memory_space<vmem>>, vector<64x64xf32>
    tpu.vector_store %arg3[%c0_3, %c0_4], %2 {strides = array<i32>} : memref<64x64xf32, #tpu.memory_space<vmem>>, vector<64x64xf32>,
    return
  }
  func.func @transform_0(%arg0: i32) -> (i32, i32) {
    %c0_i32 = arith.constant 0 : i32
    %c0_i32_0 = arith.constant 0 : i32
    return %arg0, %c0_i32 : i32, i32
  }
  func.func @transform_1(%arg0: i32) -> (i32, i32) {
    %c0_i32 = arith.constant 0 : i32
    %c0_i32_0 = arith.constant 0 : i32
    %c0_i32_1 = arith.constant 0 : i32
    return %c0_i32, %c0_i32_0 : i32, i32
  }
  func.func @transform_2(%arg0: i32) -> (i32, i32) {
    %c0_i32 = arith.constant 0 : i32
    %c0_i32_0 = arith.constant 0 : i32
    return %arg0, %c0_i32 : i32, i32
  }
}

</mosaic_0001>

<llo_original>
// kernel: tpu_custom_call.1
$region0: #{tpu_custom_call.1}
  #allocation0 [shape = 'u32[]', space=smem, size = 0x4, offset = 0x4, fixed_abs, tag = 'smem constant byte address 0x4 - core index']
  #allocation1 [shape = 'u32[144,128]{1,0:T(1,128)}', space=vmem, size = 0x12000, scoped, tag = 'internal scratch']
  %s0 = inlined_call_operand.vmem [shape: f32[128,16], index: 0, kind: input, shape index: {}]
  %s1 = inlined_call_operand.vmem [shape: f32[16,64], index: 1, kind: input, shape index: {}]
  %s2 = inlined_call_operand.vmem [shape: f32[128,64], index: 2, kind: output, shape index: {}]
  %s3 = sld [smem:[#allocation0]]
  $region41: #{tpu_custom_call.1} parent=0
    _
  %s5 = ssub.s32 1, %s3
  %s6 = scalar_select 0, %s5, %s3
  loop: start=0, step=1, limit=4
  $region2: #{tpu_custom_call.1} parent=0 // loop_pre_header
    _
  $region3: #{tpu_custom_call.1} parent=0 // loop_header
    %s8 = sphi 0, %s12
    %p9 = scmp.ge.s32.totalorder %s8, 4
    %s18 = sphi 0, %s20
    %s21 = sphi 0, %s18
    %s22 = sphi 0, %s21
    %s38 = sphi 0, %s22
    %s42 = sphi 0, %s42
    %s44 = sphi 0, %s42
    %s45 = sphi 0, %s44
    %s59 = sphi 0, %s45
    %s65 = sphi 0, %s67
    %s68 = sphi 0, %s65
    %s69 = sphi 0, %s68
    %s85 = sphi 0, %s69
  $region4: #{tpu_custom_call.1} parent=0 // loop_header_branch
    %11 = sbr.rel (%p9) target = $region8
  $region5: #{tpu_custom_call.1} parent=0 // loop_body
    %s13 = ssub.s32 %s8, 1
    %s14 = ssub.s32 %s8, 2
    %s15 = sadd.s32 %s8, 1
    %s16 = ssub.s32 %s8, %s15
    %p17 = scmp.eq.s32.totalorder %s16, 0
    %s19 = sadd.s32 %s18, 1
    %s20 = scalar_select %p17, %s18, %s19
    %p23 = pneg %p17
    %p24 = scmp.eq.s32.totalorder %s8, 1
    %p25 = por %p23, %p24
    %p26 = scmp.ne.s32.totalorder %s18, %s21
    %p27 = scmp.eq.s32.totalorder %s8, 0
    %p28 = por %p26, %p27
    %p29 = scmp.ne.s32.totalorder %s18, %s21
    %p30 = scmp.eq.s32.totalorder %s13, 1
    %p31 = por %p29, %p30
    %p32 = scmp.ne.s32.totalorder %s21, %s22
    %p33 = scmp.eq.s32.totalorder %s13, 0
    %p34 = por %p32, %p33
    %p35 = scmp.ne.s32.totalorder %s21, %s22
    %p36 = scmp.eq.s32.totalorder %s14, 1
    %p37 = por %p35, %p36
    %p39 = scmp.ne.s32.totalorder %s22, %s38
    %p40 = scmp.eq.s32.totalorder %s14, 0
    %p41 = por %p39, %p40
    %s43 = sadd.s32 %s42, 1
    %p46 = scmp.eq.s32.totalorder %s8, 1
    %p47 = scmp.ne.s32.totalorder %s42, %s44
    %p48 = scmp.eq.s32.totalorder %s8, 0
    %p49 = por %p47, %p48
    %p50 = scmp.ne.s32.totalorder %s42, %s44
    %p51 = scmp.eq.s32.totalorder %s13, 1
    %p52 = por %p50, %p51
    %p53 = scmp.ne.s32.totalorder %s44, %s45
    %p54 = scmp.eq.s32.totalorder %s13, 0
    %p55 = por %p53, %p54
    %p56 = scmp.ne.s32.totalorder %s44, %s45
    %p57 = scmp.eq.s32.totalorder %s14, 1
    %p58 = por %p56, %p57
    %p60 = scmp.ne.s32.totalorder %s45, %s59
    %p61 = scmp.eq.s32.totalorder %s14, 0
    %p62 = por %p60, %p61
    %s63 = ssub.s32 %s8, %s15
    %p64 = scmp.eq.s32.totalorder %s63, 0
    %s66 = sadd.s32 %s65, 1
    %s67 = scalar_select %p64, %s65, %s66
    %p70 = pneg %p64
    %p71 = scmp.eq.s32.totalorder %s8, 1
    %p72 = por %p70, %p71
    %p73 = scmp.ne.s32.totalorder %s65, %s68
    %p74 = scmp.eq.s32.totalorder %s8, 0
    %p75 = por %p73, %p74
    %p76 = scmp.ne.s32.totalorder %s65, %s68
    %p77 = scmp.eq.s32.totalorder %s13, 1
    %p78 = por %p76, %p77
    %p79 = scmp.ne.s32.totalorder %s68, %s69
    %p80 = scmp.eq.s32.totalorder %s13, 0
    %p81 = por %p79, %p80
    %p82 = scmp.ne.s32.totalorder %s68, %s69
    %p83 = scmp.eq.s32.totalorder %s14, 1
    %p84 = por %p82, %p83
    %p86 = scmp.ne.s32.totalorder %s69, %s85
    %p87 = scmp.eq.s32.totalorder %s14, 0
    %p88 = por %p86, %p87
    %p89 = scmp.le.s32.totalorder 1, %s8
    %p90 = scmp.lt.s32.totalorder %s8, 3
    %p91 = pnand %p89, %p90
    %p92 = pneg %p91
    // Predicated region
    $region9: #{tpu_custom_call.1} parent=5 // pred_check
      _
    $region10: #{tpu_custom_call.1} parent=5 // pred_check_branch
      %94 = sbr.rel (%p91) target = $region12
    $region11: #{tpu_custom_call.1} parent=5 // pred_region
      %s95 = ssub.s32 %s8, 1
      // Predicated region
      $region13: #{tpu_custom_call.1} parent=11 // pred_check
        %p96 = pneg %p55
      $region14: #{tpu_custom_call.1} parent=11 // pred_check_branch
        %98 = sbr.rel (%p96) target = $region16
      $region15: #{tpu_custom_call.1} parent=11 // pred_region
        _
      $region16: #{tpu_custom_call.1} parent=11 // pred_fallthru
        _
    $region12: #{tpu_custom_call.1} parent=5 // pred_fallthru
      _
    %p99 = scmp.lt.s32.totalorder %s8, 2
    // Predicated region
    $region17: #{tpu_custom_call.1} parent=5 // pred_check
      %p100 = pneg %p99
    $region18: #{tpu_custom_call.1} parent=5 // pred_check_branch
      %102 = sbr.rel (%p100) target = $region20
    $region19: #{tpu_custom_call.1} parent=5 // pred_region
      // Predicated region
      $region21: #{tpu_custom_call.1} parent=19 // pred_check
        %p103 = pneg %p28
      $region22: #{tpu_custom_call.1} parent=19 // pred_check_branch
        %105 = sbr.rel (%p103) target = $region24
      $region23: #{tpu_custom_call.1} parent=19 // pred_region
        %s106 = smul.u32 8, %s8
        %p107 = scmp.lt.s32.totalorder %s106, 15
        %s108 = scalar_select %p107, %s106, 15
        %s109 = smul.addr %s108, 8
        %s110 = scalar_lea.vmem %s0, %s109
        %s111 = smul.u32 8, %s8
      $region24: #{tpu_custom_call.1} parent=19 // pred_fallthru
        _
    $region20: #{tpu_custom_call.1} parent=5 // pred_fallthru
      _
    %p112 = scmp.le.s32.totalorder 1, %s8
    %p113 = scmp.lt.s32.totalorder %s8, 3
    %p114 = pnand %p112, %p113
    %p115 = pneg %p114
    // Predicated region
    $region25: #{tpu_custom_call.1} parent=5 // pred_check
      _
    $region26: #{tpu_custom_call.1} parent=5 // pred_check_branch
      %117 = sbr.rel (%p114) target = $region28
    $region27: #{tpu_custom_call.1} parent=5 // pred_region
      %s118 = ssub.s32 %s8, 1
      %s119 = smul.u32 8, %s13
      %p120 = scmp.lt.s32.totalorder %s119, 15
      %s121 = scalar_select %p120, %s119, 15
      %s122 = smul.addr %s121, 8
      %s123 = scalar_lea.vmem %s0, %s122
      %p124 = pneg %p34
      %p125 = pneg %p31
      %p126 = pneg %p55
      %p127 = pneg %p52
      %p128 = pneg %p81
      %p129 = pneg %p78
      %s130 = smul.u32 8, %s13
      %p131 = scmp.lt.s32.totalorder %s130, 15
      %s132 = scalar_select %p131, %s130, 15
      %s133 = smul.addr %s132, 8
      %s134 = scalar_lea.vmem %s2, %s133
      %s135 = smul.u32 8, %s13
      %p136 = scmp.lt.s32.totalorder %s135, 15
      %s137 = scalar_select %p136, %s135, 15
      %s138 = smul.addr %s137, 8
      %s139 = scalar_lea.vmem %s0, %s138
      %s140 = smul.u32 8, %s13
      %s141 = smul.u32 8, %s13
      %p142 = scmp.lt.s32.totalorder %s141, 15
      %s143 = scalar_select %p142, %s141, 15
      %s144 = smul.addr %s143, 8
      %s145 = scalar_lea.vmem %s2, %s144
      %s146 = smul.u32 8, %s13
      %v147 = vld [vmem:[%s139] sm:$0xff]
      %v148 = vld [vmem:[%s139 + $0x8] sm:$0xff]
      %v149 = vld [vmem:[%s139 + $0x10] sm:$0xff]
      %v150 = vld [vmem:[%s139 + $0x18] sm:$0xff]
      %v151 = vld [vmem:[%s139 + $0x20] sm:$0xff]
      %v152 = vld [vmem:[%s139 + $0x28] sm:$0xff]
      %v153 = vld [vmem:[%s139 + $0x30] sm:$0xff]
      %v154 = vld [vmem:[%s139 + $0x38] sm:$0xff]
      %v155 = vld [vmem:[%s1] sm:$0xff]
      %v156 = vld [vmem:[%s1 + $0x8] sm:$0xff]
      %vm157 = vcmask 130048
      %v159 = vsel %vm157, %v147, 0
      %v162 = vsel %vm157, %v148, 0
      %v165 = vsel %vm157, %v149, 0
      %v168 = vsel %vm157, %v150, 0
      %v171 = vsel %vm157, %v151, 0
      %v174 = vsel %vm157, %v152, 0
      %v177 = vsel %vm157, %v153, 0
      %v180 = vsel %vm157, %v154, 0
      %182 = vmatprep.subr.mxu0 0.0
      %v183 = vand.u32 %v155, 4294901760
      %184 = vmatpush1.msra.mxu0 %v183
      %185 = vmatprep.subr.mxu0 0.0
      %v186 = vand.u32 %v156, 4294901760
      %187 = vmatpush1.msra.mxu0 %v186
      %188 = vmatprep.subr.mxu0 0.0
      %189 = vmatpush1.msra.mxu0 0.0
      %190 = vmatprep.subr.mxu0 0.0
      %191 = vmatpush1.msra.mxu0 0.0
      %192 = vmatprep.subr.mxu0 0.0
      %193 = vmatpush1.msra.mxu0 0.0
      %194 = vmatprep.subr.mxu0 0.0
      %195 = vmatpush1.msra.mxu0 0.0
      %196 = vmatprep.subr.mxu0 0.0
      %197 = vmatpush1.msra.mxu0 0.0
      %198 = vmatprep.subr.mxu0 0.0
      %199 = vmatpush1.msra.mxu0 0.0
      %200 = vmatprep.subr.mxu0 0.0
      %201 = vmatpush1.msra.mxu0 0.0
      %202 = vmatprep.subr.mxu0 0.0
      %203 = vmatpush1.msra.mxu0 0.0
      %204 = vmatprep.subr.mxu0 0.0
      %205 = vmatpush1.msra.mxu0 0.0
      %206 = vmatprep.subr.mxu0 0.0
      %207 = vmatpush1.msra.mxu0 0.0
      %208 = vmatprep.subr.mxu0 0.0
      %209 = vmatpush1.msra.mxu0 0.0
      %210 = vmatprep.subr.mxu0 0.0
      %211 = vmatpush1.msra.mxu0 0.0
      %212 = vmatprep.subr.mxu0 0.0
      %213 = vmatpush1.msra.mxu0 0.0
      %214 = vmatprep.subr.mxu0 0.0
      %215 = vmatpush1.msra.mxu0 0.0
      %216 = vmatprep.subr.mxu0 0.0
      %217 = vmatpush1.msra.mxu0 0.0
      %218 = vmatprep.subr.mxu0 0.0
      %219 = vmatpush1.msra.mxu0 0.0
      %220 = vmatprep.subr.mxu0 0.0
      %221 = vmatpush1.msra.mxu0 0.0
      %222 = vmatprep.subr.mxu0 0.0
      %223 = vmatpush1.msra.mxu0 0.0
      %224 = vmatprep.subr.mxu0 0.0
      %225 = vmatpush1.msra.mxu0 0.0
      %226 = vmatprep.subr.mxu0 0.0
      %227 = vmatpush1.msra.mxu0 0.0
      %228 = vmatprep.subr.mxu0 0.0
      %229 = vmatpush1.msra.mxu0 0.0
      %230 = vmatprep.subr.mxu0 0.0
      %231 = vmatpush1.msra.mxu0 0.0
      %232 = vmatprep.subr.mxu0 0.0
      %233 = vmatpush1.msra.mxu0 0.0
      %234 = vmatprep.subr.mxu0 0.0
      %235 = vmatpush1.msra.mxu0 0.0
      %236 = vmatprep.subr.mxu0 0.0
      %237 = vmatpush1.msra.mxu0 0.0
      %238 = vmatprep.subr.mxu0 0.0
      %239 = vmatpush1.msra.mxu0 0.0
      %240 = vmatprep.subr.mxu0 0.0
      %241 = vmatpush1.msra.mxu0 0.0
      %242 = vmatprep.subr.mxu0 0.0
      %243 = vmatpush1.msra.mxu0 0.0
      %244 = vmatprep.subr.mxu0 0.0
      %245 = vmatpush1.msra.mxu0 0.0
      %246 = vmatprep.subr.mxu0 0.0
      %247 = vmatpush1.msra.mxu0 0.0
      %248 = vmatprep.mubr.f32.mxu0 0.0
      %v249 = vand.u32 %v159, 4294901760
      %v250 = vsub.f32 %v159, %v249
      %v251 = vand.u32 %v250, 4294901760
      %v252 = vsub.f32 %v250, %v251
      %v253 = vand.u32 %v252, 4294901760
      %254 = vmatmul.mubr.f32.gmra.mrb[0].mxu0 %v253
      %v255 = vpop.f32.mrb[0].mxu0
      %v256 = vadd.f32 0.0, %v255
      %v257 = vpop.f32.mrb[0].mxu0
      %258 = vmatprep.mubr.f32.mxu0 0.0
      %v259 = vand.u32 %v162, 4294901760
      %v260 = vsub.f32 %v162, %v259
      %v261 = vand.u32 %v260, 4294901760
      %v262 = vsub.f32 %v260, %v261
      %v263 = vand.u32 %v262, 4294901760
      %264 = vmatmul.mubr.f32.gmra.mrb[0].mxu0 %v263
      %v265 = vpop.f32.mrb[0].mxu0
      %v266 = vadd.f32 0.0, %v265
      %v267 = vpop.f32.mrb[0].mxu0
      %268 = vmatprep.mubr.f32.mxu0 0.0
      %v269 = vand.u32 %v165, 4294901760
      %v270 = vsub.f32 %v165, %v269
      %v271 = vand.u32 %v270, 4294901760
      %v272 = vsub.f32 %v270, %v271
      %v273 = vand.u32 %v272, 4294901760
      %274 = vmatmul.mubr.f32.gmra.mrb[0].mxu0 %v273
      %v275 = vpop.f32.mrb[0].mxu0
      %v276 = vadd.f32 0.0, %v275
      %v277 = vpop.f32.mrb[0].mxu0
      %278 = vmatprep.mubr.f32.mxu0 0.0
      %v279 = vand.u32 %v168, 4294901760
      %v280 = vsub.f32 %v168, %v279
      %v281 = vand.u32 %v280, 4294901760
      %v282 = vsub.f32 %v280, %v281
      %v283 = vand.u32 %v282, 4294901760
      %284 = vmatmul.mubr.f32.gmra.mrb[0].mxu0 %v283
      %v285 = vpop.f32.mrb[0].mxu0
      %v286 = vadd.f32 0.0, %v285
      %v287 = vpop.f32.mrb[0].mxu0
      %288 = vmatprep.mubr.f32.mxu0 0.0
      %v289 = vand.u32 %v171, 4294901760
      %v290 = vsub.f32 %v171, %v289
      %v291 = vand.u32 %v290, 4294901760
      %v292 = vsub.f32 %v290, %v291
      %v293 = vand.u32 %v292, 4294901760
      %294 = vmatmul.mubr.f32.gmra.mrb[0].mxu0 %v293
      %v295 = vpop.f32.mrb[0].mxu0
      %v296 = vadd.f32 0.0, %v295
      %v297 = vpop.f32.mrb[0].mxu0
      %298 = vmatprep.mubr.f32.mxu0 0.0
      %v299 = vand.u32 %v174, 4294901760
      %v300 = vsub.f32 %v174, %v299
      %v301 = vand.u32 %v300, 4294901760
      %v302 = vsub.f32 %v300, %v301
      %v303 = vand.u32 %v302, 4294901760
      %304 = vmatmul.mubr.f32.gmra.mrb[0].mxu0 %v303
      %v305 = vpop.f32.mrb[0].mxu0
      %v306 = vadd.f32 0.0, %v305
      %v307 = vpop.f32.mrb[0].mxu0
      %308 = vmatprep.mubr.f32.mxu0 0.0
      %v309 = vand.u32 %v177, 4294901760
      %v310 = vsub.f32 %v177, %v309
      %v311 = vand.u32 %v310, 4294901760
      %v312 = vsub.f32 %v310, %v311
      %v313 = vand.u32 %v312, 4294901760
      %314 = vmatmul.mubr.f32.gmra.mrb[0].mxu0 %v313
      %v315 = vpop.f32.mrb[0].mxu0
      %v316 = vadd.f32 0.0, %v315
      %v317 = vpop.f32.mrb[0].mxu0
      %318 = vmatprep.mubr.f32.mxu0 0.0
      %v319 = vand.u32 %v180, 4294901760
      %v320 = vsub.f32 %v180, %v319
      %v321 = vand.u32 %v320, 4294901760
      %v322 = vsub.f32 %v320, %v321
      %v323 = vand.u32 %v322, 4294901760
      %324 = vmatmul.mubr.f32.gmra.mrb[0].mxu0 %v323
      %v325 = vpop.f32.mrb[0].mxu0
      %v326 = vadd.f32 0.0, %v325
      %v327 = vpop.f32.mrb[0].mxu0
      %328 = vdwg.mxu0
      %329 = vmatprep.subr.mxu0 0.0
      %v330 = vand.u32 %v155, 4294901760
      %v331 = vsub.f32 %v155, %v330
      %v332 = vand.u32 %v331, 4294901760
      %v333 = vsub.f32 %v331, %v332
      %v334 = vand.u32 %v333, 4294901760
      %335 = vmatpush1.msra.mxu0 %v334
      %336 = vmatprep.subr.mxu0 0.0
      %v337 = vand.u32 %v156, 4294901760
      %v338 = vsub.f32 %v156, %v337
      %v339 = vand.u32 %v338, 4294901760
      %v340 = vsub.f32 %v338, %v339
      %v341 = vand.u32 %v340, 4294901760
      %342 = vmatpush1.msra.mxu0 %v341
      %343 = vmatprep.subr.mxu0 0.0
      %344 = vmatpush1.msra.mxu0 0.0
      %345 = vmatprep.subr.mxu0 0.0
      %346 = vmatpush1.msra.mxu0 0.0
      %347 = vmatprep.subr.mxu0 0.0
      %348 = vmatpush1.msra.mxu0 0.0
      %349 = vmatprep.subr.mxu0 0.0
      %350 = vmatpush1.msra.mxu0 0.0
      %351 = vmatprep.subr.mxu0 0.0
      %352 = vmatpush1.msra.mxu0 0.0
      %353 = vmatprep.subr.mxu0 0.0
      %354 = vmatpush1.msra.mxu0 0.0
      %355 = vmatprep.subr.mxu0 0.0
      %356 = vmatpush1.msra.mxu0 0.0
      %357 = vmatprep.subr.mxu0 0.0
      %358 = vmatpush1.msra.mxu0 0.0
      %359 = vmatprep.subr.mxu0 0.0
      %360 = vmatpush1.msra.mxu0 0.0
      %361 = vmatprep.subr.mxu0 0.0
      %362 = vmatpush1.msra.mxu0 0.0
      %363 = vmatprep.subr.mxu0 0.0
      %364 = vmatpush1.msra.mxu0 0.0
      %365 = vmatprep.subr.mxu0 0.0
      %366 = vmatpush1.msra.mxu0 0.0
      %367 = vmatprep.subr.mxu0 0.0
      %368 = vmatpush1.msra.mxu0 0.0
      %369 = vmatprep.subr.mxu0 0.0
      %370 = vmatpush1.msra.mxu0 0.0
      %371 = vmatprep.subr.mxu0 0.0
      %372 = vmatpush1.msra.mxu0 0.0
      %373 = vmatprep.subr.mxu0 0.0
      %374 = vmatpush1.msra.mxu0 0.0
      %375 = vmatprep.subr.mxu0 0.0
      %376 = vmatpush1.msra.mxu0 0.0
      %377 = vmatprep.subr.mxu0 0.0
      %378 = vmatpush1.msra.mxu0 0.0
      %379 = vmatprep.subr.mxu0 0.0
      %380 = vmatpush1.msra.mxu0 0.0
      %381 = vmatprep.subr.mxu0 0.0
      %382 = vmatpush1.msra.mxu0 0.0
      %383 = vmatprep.subr.mxu0 0.0
      %384 = vmatpush1.msra.mxu0 0.0
      %385 = vmatprep.subr.mxu0 0.0
      %386 = vmatpush1.msra.mxu0 0.0
      %387 = vmatprep.subr.mxu0 0.0
      %388 = vmatpush1.msra.mxu0 0.0
      %389 = vmatprep.subr.mxu0 0.0
      %390 = vmatpush1.msra.mxu0 0.0
      %391 = vmatprep.subr.mxu0 0.0
      %392 = vmatpush1.msra.mxu0 0.0
      %393 = vmatprep.subr.mxu0 0.0
      %394 = vmatpush1.msra.mxu0 0.0
      %395 = vmatprep.subr.mxu0 0.0
      %396 = vmatpush1.msra.mxu0 0.0
      %397 = vmatprep.subr.mxu0 0.0
      %398 = vmatpush1.msra.mxu0 0.0
      %399 = vmatprep.subr.mxu0 0.0
      %400 = vmatpush1.msra.mxu0 0.0
      %401 = vmatprep.subr.mxu0 0.0
      %402 = vmatpush1.msra.mxu0 0.0
      %403 = vmatprep.mubr.f32.mxu0 0.0
      %v404 = vand.u32 %v159, 4294901760
      %405 = vmatmul.mubr.f32.gmra.mrb[0].mxu0 %v404
      %v406 = vpop.f32.mrb[0].mxu0
      %v407 = vadd.f32 %v256, %v406
      %v408 = vpop.f32.mrb[0].mxu0
      %409 = vmatprep.mubr.f32.mxu0 0.0
      %v410 = vand.u32 %v162, 4294901760
      %411 = vmatmul.mubr.f32.gmra.mrb[0].mxu0 %v410
      %v412 = vpop.f32.mrb[0].mxu0
      %v413 = vadd.f32 %v266, %v412
      %v414 = vpop.f32.mrb[0].mxu0
      %415 = vmatprep.mubr.f32.mxu0 0.0
      %v416 = vand.u32 %v165, 4294901760
      %417 = vmatmul.mubr.f32.gmra.mrb[0].mxu0 %v416
      %v418 = vpop.f32.mrb[0].mxu0
      %v419 = vadd.f32 %v276, %v418
      %v420 = vpop.f32.mrb[0].mxu0
      %421 = vmatprep.mubr.f32.mxu0 0.0
      %v422 = vand.u32 %v168, 4294901760
      %423 = vmatmul.mubr.f32.gmra.mrb[0].mxu0 %v422
      %v424 = vpop.f32.mrb[0].mxu0
      %v425 = vadd.f32 %v286, %v424
      %v426 = vpop.f32.mrb[0].mxu0
      %427 = vmatprep.mubr.f32.mxu0 0.0
      %v428 = vand.u32 %v171, 4294901760
      %429 = vmatmul.mubr.f32.gmra.mrb[0].mxu0 %v428
      %v430 = vpop.f32.mrb[0].mxu0
      %v431 = vadd.f32 %v296, %v430
      %v432 = vpop.f32.mrb[0].mxu0
      %433 = vmatprep.mubr.f32.mxu0 0.0
      %v434 = vand.u32 %v174, 4294901760
      %435 = vmatmul.mubr.f32.gmra.mrb[0].mxu0 %v434
      %v436 = vpop.f32.mrb[0].mxu0
      %v437 = vadd.f32 %v306, %v436
      %v438 = vpop.f32.mrb[0].mxu0
      %439 = vmatprep.mubr.f32.mxu0 0.0
      %v440 = vand.u32 %v177, 4294901760
      %441 = vmatmul.mubr.f32.gmra.mrb[0].mxu0 %v440
      %v442 = vpop.f32.mrb[0].mxu0
      %v443 = vadd.f32 %v316, %v442
      %v444 = vpop.f32.mrb[0].mxu0
      %445 = vmatprep.mubr.f32.mxu0 0.0
      %v446 = vand.u32 %v180, 4294901760
      %447 = vmatmul.mubr.f32.gmra.mrb[0].mxu0 %v446
      %v448 = vpop.f32.mrb[0].mxu0
      %v449 = vadd.f32 %v326, %v448
      %v450 = vpop.f32.mrb[0].mxu0
      %451 = vdwg.mxu0
      %452 = vmatprep.subr.mxu0 0.0
      %v453 = vand.u32 %v155, 4294901760
      %v454 = vsub.f32 %v155, %v453
      %455 = vmatpush1.msra.mxu0 %v454
      %456 = vmatprep.subr.mxu0 0.0
      %v457 = vand.u32 %v156, 4294901760
      %v458 = vsub.f32 %v156, %v457
      %459 = vmatpush1.msra.mxu0 %v458
      %460 = vmatprep.subr.mxu0 0.0
      %461 = vmatpush1.msra.mxu0 0.0
      %462 = vmatprep.subr.mxu0 0.0
      %463 = vmatpush1.msra.mxu0 0.0
      %464 = vmatprep.subr.mxu0 0.0
      %465 = vmatpush1.msra.mxu0 0.0
      %466 = vmatprep.subr.mxu0 0.0
      %467 = vmatpush1.msra.mxu0 0.0
      %468 = vmatprep.subr.mxu0 0.0
      %469 = vmatpush1.msra.mxu0 0.0
      %470 = vmatprep.subr.mxu0 0.0
      %471 = vmatpush1.msra.mxu0 0.0
      %472 = vmatprep.subr.mxu0 0.0
      %473 = vmatpush1.msra.mxu0 0.0
      %474 = vmatprep.subr.mxu0 0.0
      %475 = vmatpush1.msra.mxu0 0.0
      %476 = vmatprep.subr.mxu0 0.0
      %477 = vmatpush1.msra.mxu0 0.0
      %478 = vmatprep.subr.mxu0 0.0
      %479 = vmatpush1.msra.mxu0 0.0
      %480 = vmatprep.subr.mxu0 0.0
      %481 = vmatpush1.msra.mxu0 0.0
      %482 = vmatprep.subr.mxu0 0.0
      %483 = vmatpush1.msra.mxu0 0.0
      %484 = vmatprep.subr.mxu0 0.0
      %485 = vmatpush1.msra.mxu0 0.0
      %486 = vmatprep.subr.mxu0 0.0
      %487 = vmatpush1.msra.mxu0 0.0
      %488 = vmatprep.subr.mxu0 0.0
      %489 = vmatpush1.msra.mxu0 0.0
      %490 = vmatprep.subr.mxu0 0.0
      %491 = vmatpush1.msra.mxu0 0.0
      %492 = vmatprep.subr.mxu0 0.0
      %493 = vmatpush1.msra.mxu0 0.0
      %494 = vmatprep.subr.mxu0 0.0
      %495 = vmatpush1.msra.mxu0 0.0
      %496 = vmatprep.subr.mxu0 0.0
      %497 = vmatpush1.msra.mxu0 0.0
      %498 = vmatprep.subr.mxu0 0.0
      %499 = vmatpush1.msra.mxu0 0.0
      %500 = vmatprep.subr.mxu0 0.0
      %501 = vmatpush1.msra.mxu0 0.0
      %502 = vmatprep.subr.mxu0 0.0
      %503 = vmatpush1.msra.mxu0 0.0
      %504 = vmatprep.subr.mxu0 0.0
      %505 = vmatpush1.msra.mxu0 0.0
      %506 = vmatprep.subr.mxu0 0.0
      %507 = vmatpush1.msra.mxu0 0.0
      %508 = vmatprep.subr.mxu0 0.0
      %509 = vmatpush1.msra.mxu0 0.0
      %510 = vmatprep.subr.mxu0 0.0
      %511 = vmatpush1.msra.mxu0 0.0
      %512 = vmatprep.subr.mxu0 0.0
      %513 = vmatpush1.msra.mxu0 0.0
      %514 = vmatprep.subr.mxu0 0.0
      %515 = vmatpush1.msra.mxu0 0.0
      %516 = vmatprep.subr.mxu0 0.0
      %517 = vmatpush1.msra.mxu0 0.0
      %518 = vmatprep.subr.mxu0 0.0
      %519 = vmatpush1.msra.mxu0 0.0
      %520 = vmatprep.mubr.f32.mxu0 0.0
      %v521 = vand.u32 %v159, 4294901760
      %v522 = vsub.f32 %v159, %v521
      %523 = vmatmul.mubr.f32.gmra.mrb[0].mxu0 %v522
      %v524 = vpop.f32.mrb[0].mxu0
      %v525 = vadd.f32 %v407, %v524
      %v526 = vpop.f32.mrb[0].mxu0
      %527 = vmatprep.mubr.f32.mxu0 0.0
      %v528 = vand.u32 %v162, 4294901760
      %v529 = vsub.f32 %v162, %v528
      %530 = vmatmul.mubr.f32.gmra.mrb[0].mxu0 %v529
      %v531 = vpop.f32.mrb[0].mxu0
      %v532 = vadd.f32 %v413, %v531
      %v533 = vpop.f32.mrb[0].mxu0
      %534 = vmatprep.mubr.f32.mxu0 0.0
      %v535 = vand.u32 %v165, 4294901760
      %v536 = vsub.f32 %v165, %v535
      %537 = vmatmul.mubr.f32.gmra.mrb[0].mxu0 %v536
      %v538 = vpop.f32.mrb[0].mxu0
      %v539 = vadd.f32 %v419, %v538
      %v540 = vpop.f32.mrb[0].mxu0
      %541 = vmatprep.mubr.f32.mxu0 0.0
      %v542 = vand.u32 %v168, 4294901760
      %v543 = vsub.f32 %v168, %v542
      %544 = vmatmul.mubr.f32.gmra.mrb[0].mxu0 %v543
      %v545 = vpop.f32.mrb[0].mxu0
      %v546 = vadd.f32 %v425, %v545
      %v547 = vpop.f32.mrb[0].mxu0
      %548 = vmatprep.mubr.f32.mxu0 0.0
      %v549 = vand.u32 %v171, 4294901760
      %v550 = vsub.f32 %v171, %v549
      %551 = vmatmul.mubr.f32.gmra.mrb[0].mxu0 %v550
      %v552 = vpop.f32.mrb[0].mxu0
      %v553 = vadd.f32 %v431, %v552
      %v554 = vpop.f32.mrb[0].mxu0
      %555 = vmatprep.mubr.f32.mxu0 0.0
      %v556 = vand.u32 %v174, 4294901760
      %v557 = vsub.f32 %v174, %v556
      %558 = vmatmul.mubr.f32.gmra.mrb[0].mxu0 %v557
      %v559 = vpop.f32.mrb[0].mxu0
      %v560 = vadd.f32 %v437, %v559
      %v561 = vpop.f32.mrb[0].mxu0
      %562 = vmatprep.mubr.f32.mxu0 0.0
      %v563 = vand.u32 %v177, 4294901760
      %v564 = vsub.f32 %v177, %v563
      %565 = vmatmul.mubr.f32.gmra.mrb[0].mxu0 %v564
      %v566 = vpop.f32.mrb[0].mxu0
      %v567 = vadd.f32 %v443, %v566
      %v568 = vpop.f32.mrb[0].mxu0
      %569 = vmatprep.mubr.f32.mxu0 0.0
      %v570 = vand.u32 %v180, 4294901760
      %v571 = vsub.f32 %v180, %v570
      %572 = vmatmul.mubr.f32.gmra.mrb[0].mxu0 %v571
      %v573 = vpop.f32.mrb[0].mxu0
      %v574 = vadd.f32 %v449, %v573
      %v575 = vpop.f32.mrb[0].mxu0
      %576 = vdwg.mxu0
      %577 = vmatprep.subr.mxu0 0.0
      %v578 = vand.u32 %v155, 4294901760
      %579 = vmatpush1.msra.mxu0 %v578
      %580 = vmatprep.subr.mxu0 0.0
      %v581 = vand.u32 %v156, 4294901760
      %582 = vmatpush1.msra.mxu0 %v581
      %583 = vmatprep.subr.mxu0 0.0
      %584 = vmatpush1.msra.mxu0 0.0
      %585 = vmatprep.subr.mxu0 0.0
      %586 = vmatpush1.msra.mxu0 0.0
      %587 = vmatprep.subr.mxu0 0.0
      %588 = vmatpush1.msra.mxu0 0.0
      %589 = vmatprep.subr.mxu0 0.0
      %590 = vmatpush1.msra.mxu0 0.0
      %591 = vmatprep.subr.mxu0 0.0
      %592 = vmatpush1.msra.mxu0 0.0
      %593 = vmatprep.subr.mxu0 0.0
      %594 = vmatpush1.msra.mxu0 0.0
      %595 = vmatprep.subr.mxu0 0.0
      %596 = vmatpush1.msra.mxu0 0.0
      %597 = vmatprep.subr.mxu0 0.0
      %598 = vmatpush1.msra.mxu0 0.0
      %599 = vmatprep.subr.mxu0 0.0
      %600 = vmatpush1.msra.mxu0 0.0
      %601 = vmatprep.subr.mxu0 0.0
      %602 = vmatpush1.msra.mxu0 0.0
      %603 = vmatprep.subr.mxu0 0.0
      %604 = vmatpush1.msra.mxu0 0.0
      %605 = vmatprep.subr.mxu0 0.0
      %606 = vmatpush1.msra.mxu0 0.0
      %607 = vmatprep.subr.mxu0 0.0
      %608 = vmatpush1.msra.mxu0 0.0
      %609 = vmatprep.subr.mxu0 0.0
      %610 = vmatpush1.msra.mxu0 0.0
      %611 = vmatprep.subr.mxu0 0.0
      %612 = vmatpush1.msra.mxu0 0.0
      %613 = vmatprep.subr.mxu0 0.0
      %614 = vmatpush1.msra.mxu0 0.0
      %615 = vmatprep.subr.mxu0 0.0
      %616 = vmatpush1.msra.mxu0 0.0
      %617 = vmatprep.subr.mxu0 0.0
      %618 = vmatpush1.msra.mxu0 0.0
      %619 = vmatprep.subr.mxu0 0.0
      %620 = vmatpush1.msra.mxu0 0.0
      %621 = vmatprep.subr.mxu0 0.0
      %622 = vmatpush1.msra.mxu0 0.0
      %623 = vmatprep.subr.mxu0 0.0
      %624 = vmatpush1.msra.mxu0 0.0
      %625 = vmatprep.subr.mxu0 0.0
      %626 = vmatpush1.msra.mxu0 0.0
      %627 = vmatprep.subr.mxu0 0.0
      %628 = vmatpush1.msra.mxu0 0.0
      %629 = vmatprep.subr.mxu0 0.0
      %630 = vmatpush1.msra.mxu0 0.0
      %631 = vmatprep.subr.mxu0 0.0
      %632 = vmatpush1.msra.mxu0 0.0
      %633 = vmatprep.subr.mxu0 0.0
      %634 = vmatpush1.msra.mxu0 0.0
      %635 = vmatprep.subr.mxu0 0.0
      %636 = vmatpush1.msra.mxu0 0.0
      %637 = vmatprep.subr.mxu0 0.0
      %638 = vmatpush1.msra.mxu0 0.0
      %639 = vmatprep.subr.mxu0 0.0
      %640 = vmatpush1.msra.mxu0 0.0
      %641 = vmatprep.subr.mxu0 0.0
      %642 = vmatpush1.msra.mxu0 0.0
      %643 = vmatprep.mubr.f32.mxu0 0.0
      %v644 = vand.u32 %v159, 4294901760
      %v645 = vsub.f32 %v159, %v644
      %v646 = vand.u32 %v645, 4294901760
      %647 = vmatmul.mubr.f32.gmra.mrb[0].mxu0 %v646
      %v648 = vpop.f32.mrb[0].mxu0
      %v649 = vadd.f32 %v525, %v648
      %v650 = vpop.f32.mrb[0].mxu0
      %651 = vmatprep.mubr.f32.mxu0 0.0
      %v652 = vand.u32 %v162, 4294901760
      %v653 = vsub.f32 %v162, %v652
      %v654 = vand.u32 %v653, 4294901760
      %655 = vmatmul.mubr.f32.gmra.mrb[0].mxu0 %v654
      %v656 = vpop.f32.mrb[0].mxu0
      %v657 = vadd.f32 %v532, %v656
      %v658 = vpop.f32.mrb[0].mxu0
      %659 = vmatprep.mubr.f32.mxu0 0.0
      %v660 = vand.u32 %v165, 4294901760
      %v661 = vsub.f32 %v165, %v660
      %v662 = vand.u32 %v661, 4294901760
      %663 = vmatmul.mubr.f32.gmra.mrb[0].mxu0 %v662
      %v664 = vpop.f32.mrb[0].mxu0
      %v665 = vadd.f32 %v539, %v664
      %v666 = vpop.f32.mrb[0].mxu0
      %667 = vmatprep.mubr.f32.mxu0 0.0
      %v668 = vand.u32 %v168, 4294901760
      %v669 = vsub.f32 %v168, %v668
      %v670 = vand.u32 %v669, 4294901760
      %671 = vmatmul.mubr.f32.gmra.mrb[0].mxu0 %v670
      %v672 = vpop.f32.mrb[0].mxu0
      %v673 = vadd.f32 %v546, %v672
      %v674 = vpop.f32.mrb[0].mxu0
      %675 = vmatprep.mubr.f32.mxu0 0.0
      %v676 = vand.u32 %v171, 4294901760
      %v677 = vsub.f32 %v171, %v676
      %v678 = vand.u32 %v677, 4294901760
      %679 = vmatmul.mubr.f32.gmra.mrb[0].mxu0 %v678
      %v680 = vpop.f32.mrb[0].mxu0
      %v681 = vadd.f32 %v553, %v680
      %v682 = vpop.f32.mrb[0].mxu0
      %683 = vmatprep.mubr.f32.mxu0 0.0
      %v684 = vand.u32 %v174, 4294901760
      %v685 = vsub.f32 %v174, %v684
      %v686 = vand.u32 %v685, 4294901760
      %687 = vmatmul.mubr.f32.gmra.mrb[0].mxu0 %v686
      %v688 = vpop.f32.mrb[0].mxu0
      %v689 = vadd.f32 %v560, %v688
      %v690 = vpop.f32.mrb[0].mxu0
      %691 = vmatprep.mubr.f32.mxu0 0.0
      %v692 = vand.u32 %v177, 4294901760
      %v693 = vsub.f32 %v177, %v692
      %v694 = vand.u32 %v693, 4294901760
      %695 = vmatmul.mubr.f32.gmra.mrb[0].mxu0 %v694
      %v696 = vpop.f32.mrb[0].mxu0
      %v697 = vadd.f32 %v567, %v696
      %v698 = vpop.f32.mrb[0].mxu0
      %699 = vmatprep.mubr.f32.mxu0 0.0
      %v700 = vand.u32 %v180, 4294901760
      %v701 = vsub.f32 %v180, %v700
      %v702 = vand.u32 %v701, 4294901760
      %703 = vmatmul.mubr.f32.gmra.mrb[0].mxu0 %v702
      %v704 = vpop.f32.mrb[0].mxu0
      %v705 = vadd.f32 %v574, %v704
      %v706 = vpop.f32.mrb[0].mxu0
      %707 = vdwg.mxu0
      %708 = vmatprep.subr.mxu0 0.0
      %v709 = vand.u32 %v155, 4294901760
      %v710 = vsub.f32 %v155, %v709
      %v711 = vand.u32 %v710, 4294901760
      %712 = vmatpush1.msra.mxu0 %v711
      %713 = vmatprep.subr.mxu0 0.0
      %v714 = vand.u32 %v156, 4294901760
      %v715 = vsub.f32 %v156, %v714
      %v716 = vand.u32 %v715, 4294901760
      %717 = vmatpush1.msra.mxu0 %v716
      %718 = vmatprep.subr.mxu0 0.0
      %719 = vmatpush1.msra.mxu0 0.0
      %720 = vmatprep.subr.mxu0 0.0
      %721 = vmatpush1.msra.mxu0 0.0
      %722 = vmatprep.subr.mxu0 0.0
      %723 = vmatpush1.msra.mxu0 0.0
      %724 = vmatprep.subr.mxu0 0.0
      %725 = vmatpush1.msra.mxu0 0.0
      %726 = vmatprep.subr.mxu0 0.0
      %727 = vmatpush1.msra.mxu0 0.0
      %728 = vmatprep.subr.mxu0 0.0
      %729 = vmatpush1.msra.mxu0 0.0
      %730 = vmatprep.subr.mxu0 0.0
      %731 = vmatpush1.msra.mxu0 0.0
      %732 = vmatprep.subr.mxu0 0.0
      %733 = vmatpush1.msra.mxu0 0.0
      %734 = vmatprep.subr.mxu0 0.0
      %735 = vmatpush1.msra.mxu0 0.0
      %736 = vmatprep.subr.mxu0 0.0
      %737 = vmatpush1.msra.mxu0 0.0
      %738 = vmatprep.subr.mxu0 0.0
      %739 = vmatpush1.msra.mxu0 0.0
      %740 = vmatprep.subr.mxu0 0.0
      %741 = vmatpush1.msra.mxu0 0.0
      %742 = vmatprep.subr.mxu0 0.0
      %743 = vmatpush1.msra.mxu0 0.0
      %744 = vmatprep.subr.mxu0 0.0
      %745 = vmatpush1.msra.mxu0 0.0
      %746 = vmatprep.subr.mxu0 0.0
      %747 = vmatpush1.msra.mxu0 0.0
      %748 = vmatprep.subr.mxu0 0.0
      %749 = vmatpush1.msra.mxu0 0.0
      %750 = vmatprep.subr.mxu0 0.0
      %751 = vmatpush1.msra.mxu0 0.0
      %752 = vmatprep.subr.mxu0 0.0
      %753 = vmatpush1.msra.mxu0 0.0
      %754 = vmatprep.subr.mxu0 0.0
      %755 = vmatpush1.msra.mxu0 0.0
      %756 = vmatprep.subr.mxu0 0.0
      %757 = vmatpush1.msra.mxu0 0.0
      %758 = vmatprep.subr.mxu0 0.0
      %759 = vmatpush1.msra.mxu0 0.0
      %760 = vmatprep.subr.mxu0 0.0
      %761 = vmatpush1.msra.mxu0 0.0
      %762 = vmatprep.subr.mxu0 0.0
      %763 = vmatpush1.msra.mxu0 0.0
      %764 = vmatprep.subr.mxu0 0.0
      %765 = vmatpush1.msra.mxu0 0.0
      %766 = vmatprep.subr.mxu0 0.0
      %767 = vmatpush1.msra.mxu0 0.0
      %768 = vmatprep.subr.mxu0 0.0
      %769 = vmatpush1.msra.mxu0 0.0
      %770 = vmatprep.subr.mxu0 0.0
      %771 = vmatpush1.msra.mxu0 0.0
      %772 = vmatprep.subr.mxu0 0.0
      %773 = vmatpush1.msra.mxu0 0.0
      %774 = vmatprep.subr.mxu0 0.0
      %775 = vmatpush1.msra.mxu0 0.0
      %776 = vmatprep.subr.mxu0 0.0
      %777 = vmatpush1.msra.mxu0 0.0
      %778 = vmatprep.mubr.f32.mxu0 0.0
      %v779 = vand.u32 %v159, 4294901760
      %780 = vmatmul.mubr.f32.gmra.mrb[0].mxu0 %v779
      %v781 = vpop.f32.mrb[0].mxu0
      %v782 = vadd.f32 %v649, %v781
      %v783 = vpop.f32.mrb[0].mxu0
      %784 = vmatprep.mubr.f32.mxu0 0.0
      %v785 = vand.u32 %v162, 4294901760
      %786 = vmatmul.mubr.f32.gmra.mrb[0].mxu0 %v785
      %v787 = vpop.f32.mrb[0].mxu0
      %v788 = vadd.f32 %v657, %v787
      %v789 = vpop.f32.mrb[0].mxu0
      %790 = vmatprep.mubr.f32.mxu0 0.0
      %v791 = vand.u32 %v165, 4294901760
      %792 = vmatmul.mubr.f32.gmra.mrb[0].mxu0 %v791
      %v793 = vpop.f32.mrb[0].mxu0
      %v794 = vadd.f32 %v665, %v793
      %v795 = vpop.f32.mrb[0].mxu0
      %796 = vmatprep.mubr.f32.mxu0 0.0
      %v797 = vand.u32 %v168, 4294901760
      %798 = vmatmul.mubr.f32.gmra.mrb[0].mxu0 %v797
      %v799 = vpop.f32.mrb[0].mxu0
      %v800 = vadd.f32 %v673, %v799
      %v801 = vpop.f32.mrb[0].mxu0
      %802 = vmatprep.mubr.f32.mxu0 0.0
      %v803 = vand.u32 %v171, 4294901760
      %804 = vmatmul.mubr.f32.gmra.mrb[0].mxu0 %v803
      %v805 = vpop.f32.mrb[0].mxu0
      %v806 = vadd.f32 %v681, %v805
      %v807 = vpop.f32.mrb[0].mxu0
      %808 = vmatprep.mubr.f32.mxu0 0.0
      %v809 = vand.u32 %v174, 4294901760
      %810 = vmatmul.mubr.f32.gmra.mrb[0].mxu0 %v809
      %v811 = vpop.f32.mrb[0].mxu0
      %v812 = vadd.f32 %v689, %v811
      %v813 = vpop.f32.mrb[0].mxu0
      %814 = vmatprep.mubr.f32.mxu0 0.0
      %v815 = vand.u32 %v177, 4294901760
      %816 = vmatmul.mubr.f32.gmra.mrb[0].mxu0 %v815
      %v817 = vpop.f32.mrb[0].mxu0
      %v818 = vadd.f32 %v697, %v817
      %v819 = vpop.f32.mrb[0].mxu0
      %820 = vmatprep.mubr.f32.mxu0 0.0
      %v821 = vand.u32 %v180, 4294901760
      %822 = vmatmul.mubr.f32.gmra.mrb[0].mxu0 %v821
      %v823 = vpop.f32.mrb[0].mxu0
      %v824 = vadd.f32 %v705, %v823
      %v825 = vpop.f32.mrb[0].mxu0
      %826 = vdwg.mxu0
      %827 = vmatprep.subr.mxu0 0.0
      %v828 = vand.u32 %v155, 4294901760
      %829 = vmatpush1.msra.mxu0 %v828
      %830 = vmatprep.subr.mxu0 0.0
      %v831 = vand.u32 %v156, 4294901760
      %832 = vmatpush1.msra.mxu0 %v831
      %833 = vmatprep.subr.mxu0 0.0
      %834 = vmatpush1.msra.mxu0 0.0
      %835 = vmatprep.subr.mxu0 0.0
      %836 = vmatpush1.msra.mxu0 0.0
      %837 = vmatprep.subr.mxu0 0.0
      %838 = vmatpush1.msra.mxu0 0.0
      %839 = vmatprep.subr.mxu0 0.0
      %840 = vmatpush1.msra.mxu0 0.0
      %841 = vmatprep.subr.mxu0 0.0
      %842 = vmatpush1.msra.mxu0 0.0
      %843 = vmatprep.subr.mxu0 0.0
      %844 = vmatpush1.msra.mxu0 0.0
      %845 = vmatprep.subr.mxu0 0.0
      %846 = vmatpush1.msra.mxu0 0.0
      %847 = vmatprep.subr.mxu0 0.0
      %848 = vmatpush1.msra.mxu0 0.0
      %849 = vmatprep.subr.mxu0 0.0
      %850 = vmatpush1.msra.mxu0 0.0
      %851 = vmatprep.subr.mxu0 0.0
      %852 = vmatpush1.msra.mxu0 0.0
      %853 = vmatprep.subr.mxu0 0.0
      %854 = vmatpush1.msra.mxu0 0.0
      %855 = vmatprep.subr.mxu0 0.0
      %856 = vmatpush1.msra.mxu0 0.0
      %857 = vmatprep.subr.mxu0 0.0
      %858 = vmatpush1.msra.mxu0 0.0
      %859 = vmatprep.subr.mxu0 0.0
      %860 = vmatpush1.msra.mxu0 0.0
      %861 = vmatprep.subr.mxu0 0.0
      %862 = vmatpush1.msra.mxu0 0.0
      %863 = vmatprep.subr.mxu0 0.0
      %864 = vmatpush1.msra.mxu0 0.0
      %865 = vmatprep.subr.mxu0 0.0
      %866 = vmatpush1.msra.mxu0 0.0
      %867 = vmatprep.subr.mxu0 0.0
      %868 = vmatpush1.msra.mxu0 0.0
      %869 = vmatprep.subr.mxu0 0.0
      %870 = vmatpush1.msra.mxu0 0.0
      %871 = vmatprep.subr.mxu0 0.0
      %872 = vmatpush1.msra.mxu0 0.0
      %873 = vmatprep.subr.mxu0 0.0
      %874 = vmatpush1.msra.mxu0 0.0
      %875 = vmatprep.subr.mxu0 0.0
      %876 = vmatpush1.msra.mxu0 0.0
      %877 = vmatprep.subr.mxu0 0.0
      %878 = vmatpush1.msra.mxu0 0.0
      %879 = vmatprep.subr.mxu0 0.0
      %880 = vmatpush1.msra.mxu0 0.0
      %881 = vmatprep.subr.mxu0 0.0
      %882 = vmatpush1.msra.mxu0 0.0
      %883 = vmatprep.subr.mxu0 0.0
      %884 = vmatpush1.msra.mxu0 0.0
      %885 = vmatprep.subr.mxu0 0.0
      %886 = vmatpush1.msra.mxu0 0.0
      %887 = vmatprep.subr.mxu0 0.0
      %888 = vmatpush1.msra.mxu0 0.0
      %889 = vmatprep.subr.mxu0 0.0
      %890 = vmatpush1.msra.mxu0 0.0
      %891 = vmatprep.subr.mxu0 0.0
      %892 = vmatpush1.msra.mxu0 0.0
      %893 = vmatprep.mubr.f32.mxu0 0.0
      %v894 = vand.u32 %v159, 4294901760
      %895 = vmatmul.mubr.f32.gmra.mrb[0].mxu0 %v894
      %v896 = vpop.f32.mrb[0].mxu0
      %v897 = vadd.f32 %v782, %v896
      %v898 = vpop.f32.mrb[0].mxu0
      %899 = vmatprep.mubr.f32.mxu0 0.0
      %v900 = vand.u32 %v162, 4294901760
      %901 = vmatmul.mubr.f32.gmra.mrb[0].mxu0 %v900
      %v902 = vpop.f32.mrb[0].mxu0
      %v903 = vadd.f32 %v788, %v902
      %v904 = vpop.f32.mrb[0].mxu0
      %905 = vmatprep.mubr.f32.mxu0 0.0
      %v906 = vand.u32 %v165, 4294901760
      %907 = vmatmul.mubr.f32.gmra.mrb[0].mxu0 %v906
      %v908 = vpop.f32.mrb[0].mxu0
      %v909 = vadd.f32 %v794, %v908
      %v910 = vpop.f32.mrb[0].mxu0
      %911 = vmatprep.mubr.f32.mxu0 0.0
      %v912 = vand.u32 %v168, 4294901760
      %913 = vmatmul.mubr.f32.gmra.mrb[0].mxu0 %v912
      %v914 = vpop.f32.mrb[0].mxu0
      %v915 = vadd.f32 %v800, %v914
      %v916 = vpop.f32.mrb[0].mxu0
      %917 = vmatprep.mubr.f32.mxu0 0.0
      %v918 = vand.u32 %v171, 4294901760
      %919 = vmatmul.mubr.f32.gmra.mrb[0].mxu0 %v918
      %v920 = vpop.f32.mrb[0].mxu0
      %v921 = vadd.f32 %v806, %v920
      %v922 = vpop.f32.mrb[0].mxu0
      %923 = vmatprep.mubr.f32.mxu0 0.0
      %v924 = vand.u32 %v174, 4294901760
      %925 = vmatmul.mubr.f32.gmra.mrb[0].mxu0 %v924
      %v926 = vpop.f32.mrb[0].mxu0
      %v927 = vadd.f32 %v812, %v926
      %v928 = vpop.f32.mrb[0].mxu0
      %929 = vmatprep.mubr.f32.mxu0 0.0
      %v930 = vand.u32 %v177, 4294901760
      %931 = vmatmul.mubr.f32.gmra.mrb[0].mxu0 %v930
      %v932 = vpop.f32.mrb[0].mxu0
      %v933 = vadd.f32 %v818, %v932
      %v934 = vpop.f32.mrb[0].mxu0
      %935 = vmatprep.mubr.f32.mxu0 0.0
      %v936 = vand.u32 %v180, 4294901760
      %937 = vmatmul.mubr.f32.gmra.mrb[0].mxu0 %v936
      %v938 = vpop.f32.mrb[0].mxu0
      %v939 = vadd.f32 %v824, %v938
      %v940 = vpop.f32.mrb[0].mxu0
      %941 = vdwg.mxu0
      %vm942 = vcmask 523264
      %943 = vst.msk [vmem:[%s145] sm:$0xff] %vm942, %v897
      %944 = vst.msk [vmem:[%s145 + $0x8] sm:$0xff] %vm942, %v903
      %945 = vst.msk [vmem:[%s145 + $0x10] sm:$0xff] %vm942, %v909
      %946 = vst.msk [vmem:[%s145 + $0x18] sm:$0xff] %vm942, %v915
      %947 = vst.msk [vmem:[%s145 + $0x20] sm:$0xff] %vm942, %v921
      %948 = vst.msk [vmem:[%s145 + $0x28] sm:$0xff] %vm942, %v927
      %949 = vst.msk [vmem:[%s145 + $0x30] sm:$0xff] %vm942, %v933
      %950 = vst.msk [vmem:[%s145 + $0x38] sm:$0xff] %vm942, %v939
      %s951 = smul.u32 8, %s13
      %p952 = scmp.lt.s32.totalorder %s951, 15
      %s953 = scalar_select %p952, %s951, 15
      %s954 = smul.addr %s953, 8
      %s955 = scalar_lea.vmem %s2, %s954
      // Predicated region
      $region29: #{tpu_custom_call.1} parent=27 // pred_check
        %p956 = pneg %p78
      $region30: #{tpu_custom_call.1} parent=27 // pred_check_branch
        %958 = sbr.rel (%p956) target = $region32
      $region31: #{tpu_custom_call.1} parent=27 // pred_region
        %s959 = smul.u32 8, %s13
      $region32: #{tpu_custom_call.1} parent=27 // pred_fallthru
        _
    $region28: #{tpu_custom_call.1} parent=5 // pred_fallthru
      _
    %p960 = scmp.le.s32.totalorder 2, %s8
    // Predicated region
    $region33: #{tpu_custom_call.1} parent=5 // pred_check
      %p961 = pneg %p960
    $region34: #{tpu_custom_call.1} parent=5 // pred_check_branch
      %963 = sbr.rel (%p961) target = $region36
    $region35: #{tpu_custom_call.1} parent=5 // pred_region
      %s964 = ssub.s32 %s8, 2
      // Predicated region
      $region37: #{tpu_custom_call.1} parent=35 // pred_check
        %p965 = pneg %p84
      $region38: #{tpu_custom_call.1} parent=35 // pred_check_branch
        %967 = sbr.rel (%p965) target = $region40
      $region39: #{tpu_custom_call.1} parent=35 // pred_region
        %s968 = smul.u32 8, %s14
        %p969 = scmp.lt.s32.totalorder %s968, 15
        %s970 = scalar_select %p969, %s968, 15
        %s971 = smul.addr %s970, 8
        %s972 = scalar_lea.vmem %s2, %s971
      $region40: #{tpu_custom_call.1} parent=35 // pred_fallthru
        _
    $region36: #{tpu_custom_call.1} parent=5 // pred_fallthru
      _
  $region6: #{tpu_custom_call.1} parent=0 // loop_footer
    %s12 = sadd.s32 1, %s8
  $region7: #{tpu_custom_call.1} parent=0 // loop_footer_branch
    %7 = sbr.rel target = $region3
  $region8: #{tpu_custom_call.1} parent=0 // loop_exit
    _

</llo_original>
